<compile_context>
chip_gen: v7x
topology: tpu7x:2x2x1
jax: 0.10.0
libtpu: 0.0.40
codegen_flags: <defaults>
</compile_context>

<pallas_src>
import jax
import jax.numpy as jnp
from jax import lax
from jax.experimental import pallas as pl
from jax.experimental.pallas import tpu as pltpu

BN_EPS = 1e-5


def _pick_lane_tile(hw: int) -> int:
    """Largest lane-dense (multiple of 128) tile that divides H*W, capped at 8192."""
    if hw % 128 != 0:
        # TODO(synk): pad the spatial axis to a multiple of 128 for ragged sizes;
        # a full-extent block is used instead (still correct, just less tiled).
        return hw
    for cand in (8192, 4096, 2048, 1024, 512, 256, 128):
        if cand <= hw and hw % cand == 0:
            return cand
    return hw


def _conv1x1(x, w):
    """1x1 conv as W @ X.   x: (C_in, L), w: (C_out, C_in) -> (C_out, L).

    For tiny channel counts the MXU would run at <6% utilization and we would
    pay result-FIFO latency for nothing, so the contraction is unrolled into
    VPU broadcast multiply-adds over the lane-dense L axis. For >=64 channels
    we fall back to the MXU.
    """
    c_out, c_in = w.shape
    if c_in >= 64:
        return jnp.dot(w, x, preferred_element_type=jnp.float32)
    acc = w[:, 0:1] * x[0:1, :]
    for ci in range(1, c_in):
        acc = acc + w[:, ci:ci + 1] * x[ci:ci + 1, :]
    return acc


def adapter_layer(x_nchw, params):
    """x_nchw: (N, in_c, H, W) float32 -> (N, out_c, H, W) float32."""
    N, in_c, H, W = x_nchw.shape
    HW = H * W
    bottleneck = params["w_up"].shape[0]
    out_c = params["w_dn"].shape[0]
    inv_m = 1.0 / float(N * HW)            # BN reduction size (static)

    tile_l = _pick_lane_tile(HW)
    T = HW // tile_l

    # NCHW is already channels-leading: a free reshape gives the lane-dense
    # (C, spatial) view. No transposes on either side of the pallas_call.
    x3 = x_nchw.reshape(N, in_c, HW)

    def kernel(x_ref, wup_ref, bup_ref, wdn_ref, wsc_ref,
               g1_ref, be1_ref, g2_ref, be2_ref,
               out_ref,
               sum_y_ref, ssq_y_ref, sum_s_ref, ssq_s_ref):
        phase = pl.program_id(0)   # 0: accumulate BN stats, 1: normalize+write
        n = pl.program_id(1)
        t = pl.program_id(2)

        @pl.when((phase == 0) & (n == 0) & (t == 0))
        def _init():
            sum_y_ref[...] = jnp.zeros_like(sum_y_ref)
            ssq_y_ref[...] = jnp.zeros_like(ssq_y_ref)
            sum_s_ref[...] = jnp.zeros_like(sum_s_ref)
            ssq_s_ref[...] = jnp.zeros_like(ssq_s_ref)

        x = x_ref[...].astype(jnp.float32)                       # (in_c, L)

        # up_project + ReLU (bias kept: it precedes the nonlinearity).
        h = jnp.maximum(_conv1x1(x, wup_ref[...]) + bup_ref[...], 0.0)
        # down_project / shortcut conv. Their biases are intentionally dropped:
        # the training-mode BatchNorm right after subtracts the per-channel
        # mean, which cancels any per-channel constant exactly.
        y = _conv1x1(h, wdn_ref[...])                            # (out_c, L)
        s = _conv1x1(x, wsc_ref[...])                            # (out_c, L)

        @pl.when(phase == 0)
        def _accumulate():
            sum_y_ref[...] += jnp.sum(y, axis=1, keepdims=True)
            ssq_y_ref[...] += jnp.sum(y * y, axis=1, keepdims=True)
            sum_s_ref[...] += jnp.sum(s, axis=1, keepdims=True)
            ssq_s_ref[...] += jnp.sum(s * s, axis=1, keepdims=True)

        @pl.when(phase == 1)
        def _normalize():
            # f32 moment accumulation; E[x^2] - mean^2 is fine at these
            # magnitudes (Welford would be needed only for huge M / bf16).
            mean_y = sum_y_ref[...] * inv_m
            var_y = jnp.maximum(ssq_y_ref[...] * inv_m - mean_y * mean_y, 0.0)
            a1 = g1_ref[...] * lax.rsqrt(var_y + BN_EPS)
            c1 = be1_ref[...] - mean_y * a1

            mean_s = sum_s_ref[...] * inv_m
            var_s = jnp.maximum(ssq_s_ref[...] * inv_m - mean_s * mean_s, 0.0)
            a2 = g2_ref[...] * lax.rsqrt(var_s + BN_EPS)
            c2 = be2_ref[...] - mean_s * a2

            out_ref[...] = (y * a1 + s * a2 + (c1 + c2)).astype(out_ref.dtype)

    def full(shape):
        return pl.BlockSpec(shape, lambda p, n, t: (0,) * len(shape))

    grid_spec = pltpu.PrefetchScalarGridSpec(
        num_scalar_prefetch=0,
        grid=(2, N, T),
        in_specs=[
            pl.BlockSpec((None, in_c, tile_l), lambda p, n, t: (n, 0, t)),
            full((bottleneck, in_c)),      # w_up
            full((bottleneck, 1)),         # b_up
            full((out_c, bottleneck)),     # w_dn
            full((out_c, in_c)),           # w_sc
            full((out_c, 1)),              # gamma1
            full((out_c, 1)),              # beta1
            full((out_c, 1)),              # gamma2
            full((out_c, 1)),              # beta2
        ],
        # During phase 0 every step maps to output block (0,0,0); it only starts
        # advancing in phase 1, so each output block is written to HBM exactly
        # once (lane-dense, unmasked stores) and never revisited.
        out_specs=pl.BlockSpec((None, out_c, tile_l),
                               lambda p, n, t: (n * p, 0, t * p)),
        scratch_shapes=[pltpu.VMEM((out_c, 1), jnp.float32)] * 4,
    )

    out3 = pl.pallas_call(
        kernel,
        out_shape=jax.ShapeDtypeStruct((N, out_c, HW), jnp.float32),
        grid_spec=grid_spec,
        compiler_params=pltpu.CompilerParams(
            # BN statistics carry across every grid axis -> all 'arbitrary'.
            # TODO(synk): v7x megacore would need per-core partial BN stats
            # combined across cores before a 'parallel' axis can be used.
            dimension_semantics=("arbitrary", "arbitrary", "arbitrary"),
            vmem_limit_bytes=32 * 1024 * 1024,  # explicit, fits v5e/v6e/v7x
        ),
    )(
        x3,
        params["w_up"], params["b_up"], params["w_dn"], params["w_sc"],
        params["gamma1"], params["beta1"], params["gamma2"], params["beta2"],
    )

    return out3.reshape(N, out_c, H, W)


def init_params(key, in_c, out_c, bottleneck):
    """Synthetic parameters mirroring the nn.Module shapes.

    1x1 Conv2d weights (out, in, 1, 1) are stored as (out, in) matrices; biases
    and BN affine params as (C, 1) columns (channel on the sublane axis).
    b_dn / b_sc are produced only for the pure-JAX reference: they are
    cancelled exactly by the training-mode BatchNorm that follows, so the
    kernel does not consume them.
    """
    k1, k2, k3, k4, k5, k6 = jax.random.split(key, 6)
    f32 = jnp.float32
    return {
        "w_up": (0.1 * jax.random.normal(k1, (bottleneck, in_c))).astype(f32),
        "b_up": (0.1 * jax.random.normal(k2, (bottleneck, 1))).astype(f32),
        "w_dn": (0.1 * jax.random.normal(k3, (out_c, bottleneck))).astype(f32),
        "b_dn": (0.1 * jax.random.normal(k4, (out_c, 1))).astype(f32),
        "gamma1": jnp.ones((out_c, 1), f32),
        "beta1": jnp.zeros((out_c, 1), f32),
        "w_sc": (0.1 * jax.random.normal(k5, (out_c, in_c))).astype(f32),
        "b_sc": (0.1 * jax.random.normal(k6, (out_c, 1))).astype(f32),
        "gamma2": jnp.ones((out_c, 1), f32),
        "beta2": jnp.zeros((out_c, 1), f32),
    }


def adapter_reference(x, params):
    """Pure-JAX reference of the PyTorch forward (training-mode BN), including
    the b_dn / b_sc biases the kernel drops (BN cancels them exactly)."""
    def conv1x1(inp, w, b):
        return jnp.einsum("oi,nihw->nohw", w, inp) + b.reshape(1, -1, 1, 1)

    def bn(z, gamma, beta):
        mean = jnp.mean(z, axis=(0, 2, 3), keepdims=True)
        var = jnp.mean((z - mean) ** 2, axis=(0, 2, 3), keepdims=True)
        zn = (z - mean) * lax.rsqrt(var + BN_EPS)
        return zn * gamma.reshape(1, -1, 1, 1) + beta.reshape(1, -1, 1, 1)

    h = jax.nn.relu(conv1x1(x, params["w_up"], params["b_up"][:, 0]))
    y = bn(conv1x1(h, params["w_dn"], params["b_dn"][:, 0]),
           params["gamma1"][:, 0], params["beta1"][:, 0])
    s = bn(conv1x1(x, params["w_sc"], params["b_sc"][:, 0]),
           params["gamma2"][:, 0], params["beta2"][:, 0])
    return y + s


if __name__ == "__main__":
    # Small shapes consistent with the module's forward.
    N, in_c, H, W = 2, 4, 16, 16
    out_c, bottleneck = 8, 16

    key = jax.random.PRNGKey(0)
    kx, kp = jax.random.split(key)
    x = jax.random.normal(kx, (N, in_c, H, W), dtype=jnp.float32)
    params = init_params(kp, in_c, out_c, bottleneck)

    out = jax.block_until_ready(adapter_layer(x, params))

    assert out.shape == (N, out_c, H, W)
    assert bool(jnp.all(jnp.isfinite(out)))

    ref = adapter_reference(x, params)
    max_err = float(jnp.max(jnp.abs(out - ref)))
    assert max_err < 1e-3, f"mismatch vs reference: max abs err {max_err}"

    print("KERNEL_OK")
</pallas_src>

<mosaic_0001>
module attributes {stable_mosaic.version = 11 : i64} {
  func.func @kernel(%arg0: i32, %arg1: i32, %arg2: i32, %arg3: memref<1x4x256xf32, #tpu.memory_space<vmem>>, %arg4: memref<16x4xf32, #tpu.memory_space<vmem>>, %arg5: memref<16x1xf32, #tpu.memory_space<vmem>>, %arg6: memref<8x16xf32, #tpu.memory_space<vmem>>, %arg7: memref<8x4xf32, #tpu.memory_space<vmem>>, %arg8: memref<8x1xf32, #tpu.memory_space<vmem>>, %arg9: memref<8x1xf32, #tpu.memory_space<vmem>>, %arg10: memref<8x1xf32, #tpu.memory_space<vmem>>, %arg11: memref<8x1xf32, #tpu.memory_space<vmem>>, %arg12: memref<1x8x256xf32, #tpu.memory_space<vmem>>, %arg13: memref<8x1xf32, #tpu.memory_space<vmem>>, %arg14: memref<8x1xf32, #tpu.memory_space<vmem>>, %arg15: memref<8x1xf32, #tpu.memory_space<vmem>>, %arg16: memref<8x1xf32, #tpu.memory_space<vmem>>) attributes {dimension_semantics = [#tpu.dimension_semantics<arbitrary>, #tpu.dimension_semantics<arbitrary>, #tpu.dimension_semantics<arbitrary>], iteration_bounds = array<i64: 2, 2, 1>, scalar_prefetch = 0 : i64, scratch_operands = 4 : i64, tpu.core_type = #tpu.core_type<tc>, window_params = [{transform_indices = @transform_0, window_bounds = array<i64: 1, 4, 256>}, {pipeline_mode = #tpu.pipeline_mode<synchronous>, transform_indices = @transform_1, window_bounds = array<i64: 16, 4>}, {pipeline_mode = #tpu.pipeline_mode<synchronous>, transform_indices = @transform_2, window_bounds = array<i64: 16, 1>}, {pipeline_mode = #tpu.pipeline_mode<synchronous>, transform_indices = @transform_3, window_bounds = array<i64: 8, 16>}, {pipeline_mode = #tpu.pipeline_mode<synchronous>, transform_indices = @transform_4, window_bounds = array<i64: 8, 4>}, {pipeline_mode = #tpu.pipeline_mode<synchronous>, transform_indices = @transform_5, window_bounds = array<i64: 8, 1>}, {pipeline_mode = #tpu.pipeline_mode<synchronous>, transform_indices = @transform_6, window_bounds = array<i64: 8, 1>}, {pipeline_mode = #tpu.pipeline_mode<synchronous>, transform_indices = @transform_7, window_bounds = array<i64: 8, 1>}, {pipeline_mode = #tpu.pipeline_mode<synchronous>, transform_indices = @transform_8, window_bounds = array<i64: 8, 1>}, {transform_indices = @transform_9, window_bounds = array<i64: 1, 8, 256>}]} {
    %c0_i32 = arith.constant 0 : i32
    %0 = arith.cmpi eq, %arg0, %c0_i32 : i32
    %c0_i32_0 = arith.constant 0 : i32
    %1 = arith.cmpi eq, %arg1, %c0_i32_0 : i32
    %2 = arith.andi %0, %1 : i1
    %c0_i32_1 = arith.constant 0 : i32
    %3 = arith.cmpi eq, %arg2, %c0_i32_1 : i32
    %4 = arith.andi %2, %3 : i1
    %5 = arith.extui %4 : i1 to i32
    %c0_i32_2 = arith.constant 0 : i32
    %6 = arith.cmpi ne, %5, %c0_i32_2 : i32
    scf.if %6 {
      %cst_16 = arith.constant 0.000000e+00 : f32
      %164 = vector.broadcast %cst_16 : f32 to vector<8x1xf32>
      %c0_17 = arith.constant 0 : index
      %c0_18 = arith.constant 0 : index
      %165 = vector.load %arg13[%c0_17, %c0_18] : memref<8x1xf32, #tpu.memory_space<vmem>>, vector<8x1xf32>
      tpu.vector_store %arg13[%c0_17, %c0_18], %164 {strides = array<i32>} : memref<8x1xf32, #tpu.memory_space<vmem>>, vector<8x1xf32>,
      %cst_19 = arith.constant 0.000000e+00 : f32
      %166 = vector.broadcast %cst_19 : f32 to vector<8x1xf32>
      %c0_20 = arith.constant 0 : index
      %c0_21 = arith.constant 0 : index
      %167 = vector.load %arg14[%c0_20, %c0_21] : memref<8x1xf32, #tpu.memory_space<vmem>>, vector<8x1xf32>
      tpu.vector_store %arg14[%c0_20, %c0_21], %166 {strides = array<i32>} : memref<8x1xf32, #tpu.memory_space<vmem>>, vector<8x1xf32>,
      %cst_22 = arith.constant 0.000000e+00 : f32
      %168 = vector.broadcast %cst_22 : f32 to vector<8x1xf32>
      %c0_23 = arith.constant 0 : index
      %c0_24 = arith.constant 0 : index
      %169 = vector.load %arg15[%c0_23, %c0_24] : memref<8x1xf32, #tpu.memory_space<vmem>>, vector<8x1xf32>
      tpu.vector_store %arg15[%c0_23, %c0_24], %168 {strides = array<i32>} : memref<8x1xf32, #tpu.memory_space<vmem>>, vector<8x1xf32>,
      %cst_25 = arith.constant 0.000000e+00 : f32
      %170 = vector.broadcast %cst_25 : f32 to vector<8x1xf32>
      %c0_26 = arith.constant 0 : index
      %c0_27 = arith.constant 0 : index
      %171 = vector.load %arg16[%c0_26, %c0_27] : memref<8x1xf32, #tpu.memory_space<vmem>>, vector<8x1xf32>
      tpu.vector_store %arg16[%c0_26, %c0_27], %170 {strides = array<i32>} : memref<8x1xf32, #tpu.memory_space<vmem>>, vector<8x1xf32>,
    } else {
    }
    %c0 = arith.constant 0 : index
    %c0_3 = arith.constant 0 : index
    %c0_4 = arith.constant 0 : index
    %7 = vector.load %arg3[%c0, %c0_3, %c0_4] : memref<1x4x256xf32, #tpu.memory_space<vmem>>, vector<1x4x256xf32>
    %8 = vector.shape_cast %7 : vector<1x4x256xf32> to vector<4x256xf32>
    %c0_5 = arith.constant 0 : index
    %c0_6 = arith.constant 0 : index
    %9 = vector.load %arg4[%c0_5, %c0_6] : memref<16x4xf32, #tpu.memory_space<vmem>>, vector<16x4xf32>
    %10 = vector.extract_strided_slice %9 {offsets = [0, 0], sizes = [16, 1], strides = [1, 1]} : vector<16x4xf32> to vector<16x1xf32>
    %11 = vector.extract_strided_slice %8 {offsets = [0, 0], sizes = [1, 256], strides = [1, 1]} : vector<4x256xf32> to vector<1x256xf32>
    %12 = vector.broadcast %10 : vector<16x1xf32> to vector<16x256xf32>
    %13 = vector.broadcast %11 : vector<1x256xf32> to vector<16x256xf32>
    %14 = arith.mulf %12, %13 : vector<16x256xf32>
    %15 = vector.extract_strided_slice %9 {offsets = [0, 1], sizes = [16, 1], strides = [1, 1]} : vector<16x4xf32> to vector<16x1xf32>
    %16 = vector.extract_strided_slice %8 {offsets = [1, 0], sizes = [1, 256], strides = [1, 1]} : vector<4x256xf32> to vector<1x256xf32>
    %17 = vector.broadcast %15 : vector<16x1xf32> to vector<16x256xf32>
    %18 = vector.broadcast %16 : vector<1x256xf32> to vector<16x256xf32>
    %19 = arith.mulf %17, %18 : vector<16x256xf32>
    %20 = arith.addf %14, %19 : vector<16x256xf32>
    %21 = vector.extract_strided_slice %9 {offsets = [0, 2], sizes = [16, 1], strides = [1, 1]} : vector<16x4xf32> to vector<16x1xf32>
    %22 = vector.extract_strided_slice %8 {offsets = [2, 0], sizes = [1, 256], strides = [1, 1]} : vector<4x256xf32> to vector<1x256xf32>
    %23 = vector.broadcast %21 : vector<16x1xf32> to vector<16x256xf32>
    %24 = vector.broadcast %22 : vector<1x256xf32> to vector<16x256xf32>
    %25 = arith.mulf %23, %24 : vector<16x256xf32>
    %26 = arith.addf %20, %25 : vector<16x256xf32>
    %27 = vector.extract_strided_slice %9 {offsets = [0, 3], sizes = [16, 1], strides = [1, 1]} : vector<16x4xf32> to vector<16x1xf32>
    %28 = vector.extract_strided_slice %8 {offsets = [3, 0], sizes = [1, 256], strides = [1, 1]} : vector<4x256xf32> to vector<1x256xf32>
    %29 = vector.broadcast %27 : vector<16x1xf32> to vector<16x256xf32>
    %30 = vector.broadcast %28 : vector<1x256xf32> to vector<16x256xf32>
    %31 = arith.mulf %29, %30 : vector<16x256xf32>
    %32 = arith.addf %26, %31 : vector<16x256xf32>
    %c0_7 = arith.constant 0 : index
    %c0_8 = arith.constant 0 : index
    %33 = vector.load %arg5[%c0_7, %c0_8] : memref<16x1xf32, #tpu.memory_space<vmem>>, vector<16x1xf32>
    %34 = vector.broadcast %33 : vector<16x1xf32> to vector<16x256xf32>
    %35 = arith.addf %32, %34 : vector<16x256xf32>
    %cst = arith.constant 0.000000e+00 : f32
    %36 = vector.broadcast %cst : f32 to vector<16x256xf32>
    %37 = arith.maximumf %35, %36 : vector<16x256xf32>
    %c0_9 = arith.constant 0 : index
    %c0_10 = arith.constant 0 : index
    %38 = vector.load %arg6[%c0_9, %c0_10] : memref<8x16xf32, #tpu.memory_space<vmem>>, vector<8x16xf32>
    %39 = vector.extract_strided_slice %38 {offsets = [0, 0], sizes = [8, 1], strides = [1, 1]} : vector<8x16xf32> to vector<8x1xf32>
    %40 = vector.extract_strided_slice %37 {offsets = [0, 0], sizes = [1, 256], strides = [1, 1]} : vector<16x256xf32> to vector<1x256xf32>
    %41 = vector.broadcast %39 : vector<8x1xf32> to vector<8x256xf32>
    %42 = vector.broadcast %40 : vector<1x256xf32> to vector<8x256xf32>
    %43 = arith.mulf %41, %42 : vector<8x256xf32>
    %44 = vector.extract_strided_slice %38 {offsets = [0, 1], sizes = [8, 1], strides = [1, 1]} : vector<8x16xf32> to vector<8x1xf32>
    %45 = vector.extract_strided_slice %37 {offsets = [1, 0], sizes = [1, 256], strides = [1, 1]} : vector<16x256xf32> to vector<1x256xf32>
    %46 = vector.broadcast %44 : vector<8x1xf32> to vector<8x256xf32>
    %47 = vector.broadcast %45 : vector<1x256xf32> to vector<8x256xf32>
    %48 = arith.mulf %46, %47 : vector<8x256xf32>
    %49 = arith.addf %43, %48 : vector<8x256xf32>
    %50 = vector.extract_strided_slice %38 {offsets = [0, 2], sizes = [8, 1], strides = [1, 1]} : vector<8x16xf32> to vector<8x1xf32>
    %51 = vector.extract_strided_slice %37 {offsets = [2, 0], sizes = [1, 256], strides = [1, 1]} : vector<16x256xf32> to vector<1x256xf32>
    %52 = vector.broadcast %50 : vector<8x1xf32> to vector<8x256xf32>
    %53 = vector.broadcast %51 : vector<1x256xf32> to vector<8x256xf32>
    %54 = arith.mulf %52, %53 : vector<8x256xf32>
    %55 = arith.addf %49, %54 : vector<8x256xf32>
    %56 = vector.extract_strided_slice %38 {offsets = [0, 3], sizes = [8, 1], strides = [1, 1]} : vector<8x16xf32> to vector<8x1xf32>
    %57 = vector.extract_strided_slice %37 {offsets = [3, 0], sizes = [1, 256], strides = [1, 1]} : vector<16x256xf32> to vector<1x256xf32>
    %58 = vector.broadcast %56 : vector<8x1xf32> to vector<8x256xf32>
    %59 = vector.broadcast %57 : vector<1x256xf32> to vector<8x256xf32>
    %60 = arith.mulf %58, %59 : vector<8x256xf32>
    %61 = arith.addf %55, %60 : vector<8x256xf32>
    %62 = vector.extract_strided_slice %38 {offsets = [0, 4], sizes = [8, 1], strides = [1, 1]} : vector<8x16xf32> to vector<8x1xf32>
    %63 = vector.extract_strided_slice %37 {offsets = [4, 0], sizes = [1, 256], strides = [1, 1]} : vector<16x256xf32> to vector<1x256xf32>
    %64 = vector.broadcast %62 : vector<8x1xf32> to vector<8x256xf32>
    %65 = vector.broadcast %63 : vector<1x256xf32> to vector<8x256xf32>
    %66 = arith.mulf %64, %65 : vector<8x256xf32>
    %67 = arith.addf %61, %66 : vector<8x256xf32>
    %68 = vector.extract_strided_slice %38 {offsets = [0, 5], sizes = [8, 1], strides = [1, 1]} : vector<8x16xf32> to vector<8x1xf32>
    %69 = vector.extract_strided_slice %37 {offsets = [5, 0], sizes = [1, 256], strides = [1, 1]} : vector<16x256xf32> to vector<1x256xf32>
    %70 = vector.broadcast %68 : vector<8x1xf32> to vector<8x256xf32>
    %71 = vector.broadcast %69 : vector<1x256xf32> to vector<8x256xf32>
    %72 = arith.mulf %70, %71 : vector<8x256xf32>
    %73 = arith.addf %67, %72 : vector<8x256xf32>
    %74 = vector.extract_strided_slice %38 {offsets = [0, 6], sizes = [8, 1], strides = [1, 1]} : vector<8x16xf32> to vector<8x1xf32>
    %75 = vector.extract_strided_slice %37 {offsets = [6, 0], sizes = [1, 256], strides = [1, 1]} : vector<16x256xf32> to vector<1x256xf32>
    %76 = vector.broadcast %74 : vector<8x1xf32> to vector<8x256xf32>
    %77 = vector.broadcast %75 : vector<1x256xf32> to vector<8x256xf32>
    %78 = arith.mulf %76, %77 : vector<8x256xf32>
    %79 = arith.addf %73, %78 : vector<8x256xf32>
    %80 = vector.extract_strided_slice %38 {offsets = [0, 7], sizes = [8, 1], strides = [1, 1]} : vector<8x16xf32> to vector<8x1xf32>
    %81 = vector.extract_strided_slice %37 {offsets = [7, 0], sizes = [1, 256], strides = [1, 1]} : vector<16x256xf32> to vector<1x256xf32>
    %82 = vector.broadcast %80 : vector<8x1xf32> to vector<8x256xf32>
    %83 = vector.broadcast %81 : vector<1x256xf32> to vector<8x256xf32>
    %84 = arith.mulf %82, %83 : vector<8x256xf32>
    %85 = arith.addf %79, %84 : vector<8x256xf32>
    %86 = vector.extract_strided_slice %38 {offsets = [0, 8], sizes = [8, 1], strides = [1, 1]} : vector<8x16xf32> to vector<8x1xf32>
    %87 = vector.extract_strided_slice %37 {offsets = [8, 0], sizes = [1, 256], strides = [1, 1]} : vector<16x256xf32> to vector<1x256xf32>
    %88 = vector.broadcast %86 : vector<8x1xf32> to vector<8x256xf32>
    %89 = vector.broadcast %87 : vector<1x256xf32> to vector<8x256xf32>
    %90 = arith.mulf %88, %89 : vector<8x256xf32>
    %91 = arith.addf %85, %90 : vector<8x256xf32>
    %92 = vector.extract_strided_slice %38 {offsets = [0, 9], sizes = [8, 1], strides = [1, 1]} : vector<8x16xf32> to vector<8x1xf32>
    %93 = vector.extract_strided_slice %37 {offsets = [9, 0], sizes = [1, 256], strides = [1, 1]} : vector<16x256xf32> to vector<1x256xf32>
    %94 = vector.broadcast %92 : vector<8x1xf32> to vector<8x256xf32>
    %95 = vector.broadcast %93 : vector<1x256xf32> to vector<8x256xf32>
    %96 = arith.mulf %94, %95 : vector<8x256xf32>
    %97 = arith.addf %91, %96 : vector<8x256xf32>
    %98 = vector.extract_strided_slice %38 {offsets = [0, 10], sizes = [8, 1], strides = [1, 1]} : vector<8x16xf32> to vector<8x1xf32>
    %99 = vector.extract_strided_slice %37 {offsets = [10, 0], sizes = [1, 256], strides = [1, 1]} : vector<16x256xf32> to vector<1x256xf32>
    %100 = vector.broadcast %98 : vector<8x1xf32> to vector<8x256xf32>
    %101 = vector.broadcast %99 : vector<1x256xf32> to vector<8x256xf32>
    %102 = arith.mulf %100, %101 : vector<8x256xf32>
    %103 = arith.addf %97, %102 : vector<8x256xf32>
    %104 = vector.extract_strided_slice %38 {offsets = [0, 11], sizes = [8, 1], strides = [1, 1]} : vector<8x16xf32> to vector<8x1xf32>
    %105 = vector.extract_strided_slice %37 {offsets = [11, 0], sizes = [1, 256], strides = [1, 1]} : vector<16x256xf32> to vector<1x256xf32>
    %106 = vector.broadcast %104 : vector<8x1xf32> to vector<8x256xf32>
    %107 = vector.broadcast %105 : vector<1x256xf32> to vector<8x256xf32>
    %108 = arith.mulf %106, %107 : vector<8x256xf32>
    %109 = arith.addf %103, %108 : vector<8x256xf32>
    %110 = vector.extract_strided_slice %38 {offsets = [0, 12], sizes = [8, 1], strides = [1, 1]} : vector<8x16xf32> to vector<8x1xf32>
    %111 = vector.extract_strided_slice %37 {offsets = [12, 0], sizes = [1, 256], strides = [1, 1]} : vector<16x256xf32> to vector<1x256xf32>
    %112 = vector.broadcast %110 : vector<8x1xf32> to vector<8x256xf32>
    %113 = vector.broadcast %111 : vector<1x256xf32> to vector<8x256xf32>
    %114 = arith.mulf %112, %113 : vector<8x256xf32>
    %115 = arith.addf %109, %114 : vector<8x256xf32>
    %116 = vector.extract_strided_slice %38 {offsets = [0, 13], sizes = [8, 1], strides = [1, 1]} : vector<8x16xf32> to vector<8x1xf32>
    %117 = vector.extract_strided_slice %37 {offsets = [13, 0], sizes = [1, 256], strides = [1, 1]} : vector<16x256xf32> to vector<1x256xf32>
    %118 = vector.broadcast %116 : vector<8x1xf32> to vector<8x256xf32>
    %119 = vector.broadcast %117 : vector<1x256xf32> to vector<8x256xf32>
    %120 = arith.mulf %118, %119 : vector<8x256xf32>
    %121 = arith.addf %115, %120 : vector<8x256xf32>
    %122 = vector.extract_strided_slice %38 {offsets = [0, 14], sizes = [8, 1], strides = [1, 1]} : vector<8x16xf32> to vector<8x1xf32>
    %123 = vector.extract_strided_slice %37 {offsets = [14, 0], sizes = [1, 256], strides = [1, 1]} : vector<16x256xf32> to vector<1x256xf32>
    %124 = vector.broadcast %122 : vector<8x1xf32> to vector<8x256xf32>
    %125 = vector.broadcast %123 : vector<1x256xf32> to vector<8x256xf32>
    %126 = arith.mulf %124, %125 : vector<8x256xf32>
    %127 = arith.addf %121, %126 : vector<8x256xf32>
    %128 = vector.extract_strided_slice %38 {offsets = [0, 15], sizes = [8, 1], strides = [1, 1]} : vector<8x16xf32> to vector<8x1xf32>
    %129 = vector.extract_strided_slice %37 {offsets = [15, 0], sizes = [1, 256], strides = [1, 1]} : vector<16x256xf32> to vector<1x256xf32>
    %130 = vector.broadcast %128 : vector<8x1xf32> to vector<8x256xf32>
    %131 = vector.broadcast %129 : vector<1x256xf32> to vector<8x256xf32>
    %132 = arith.mulf %130, %131 : vector<8x256xf32>
    %133 = arith.addf %127, %132 : vector<8x256xf32>
    %c0_11 = arith.constant 0 : index
    %c0_12 = arith.constant 0 : index
    %134 = vector.load %arg7[%c0_11, %c0_12] : memref<8x4xf32, #tpu.memory_space<vmem>>, vector<8x4xf32>
    %135 = vector.extract_strided_slice %134 {offsets = [0, 0], sizes = [8, 1], strides = [1, 1]} : vector<8x4xf32> to vector<8x1xf32>
    %136 = vector.extract_strided_slice %8 {offsets = [0, 0], sizes = [1, 256], strides = [1, 1]} : vector<4x256xf32> to vector<1x256xf32>
    %137 = vector.broadcast %135 : vector<8x1xf32> to vector<8x256xf32>
    %138 = vector.broadcast %136 : vector<1x256xf32> to vector<8x256xf32>
    %139 = arith.mulf %137, %138 : vector<8x256xf32>
    %140 = vector.extract_strided_slice %134 {offsets = [0, 1], sizes = [8, 1], strides = [1, 1]} : vector<8x4xf32> to vector<8x1xf32>
    %141 = vector.extract_strided_slice %8 {offsets = [1, 0], sizes = [1, 256], strides = [1, 1]} : vector<4x256xf32> to vector<1x256xf32>
    %142 = vector.broadcast %140 : vector<8x1xf32> to vector<8x256xf32>
    %143 = vector.broadcast %141 : vector<1x256xf32> to vector<8x256xf32>
    %144 = arith.mulf %142, %143 : vector<8x256xf32>
    %145 = arith.addf %139, %144 : vector<8x256xf32>
    %146 = vector.extract_strided_slice %134 {offsets = [0, 2], sizes = [8, 1], strides = [1, 1]} : vector<8x4xf32> to vector<8x1xf32>
    %147 = vector.extract_strided_slice %8 {offsets = [2, 0], sizes = [1, 256], strides = [1, 1]} : vector<4x256xf32> to vector<1x256xf32>
    %148 = vector.broadcast %146 : vector<8x1xf32> to vector<8x256xf32>
    %149 = vector.broadcast %147 : vector<1x256xf32> to vector<8x256xf32>
    %150 = arith.mulf %148, %149 : vector<8x256xf32>
    %151 = arith.addf %145, %150 : vector<8x256xf32>
    %152 = vector.extract_strided_slice %134 {offsets = [0, 3], sizes = [8, 1], strides = [1, 1]} : vector<8x4xf32> to vector<8x1xf32>
    %153 = vector.extract_strided_slice %8 {offsets = [3, 0], sizes = [1, 256], strides = [1, 1]} : vector<4x256xf32> to vector<1x256xf32>
    %154 = vector.broadcast %152 : vector<8x1xf32> to vector<8x256xf32>
    %155 = vector.broadcast %153 : vector<1x256xf32> to vector<8x256xf32>
    %156 = arith.mulf %154, %155 : vector<8x256xf32>
    %157 = arith.addf %151, %156 : vector<8x256xf32>
    %c0_i32_13 = arith.constant 0 : i32
    %158 = arith.cmpi eq, %arg0, %c0_i32_13 : i32
    %159 = arith.extui %158 : i1 to i32
    %c0_i32_14 = arith.constant 0 : i32
    %160 = arith.cmpi ne, %159, %c0_i32_14 : i32
    scf.if %160 {
      %c0_16 = arith.constant 0 : index
      %c0_17 = arith.constant 0 : index
      %164 = vector.load %arg13[%c0_16, %c0_17] : memref<8x1xf32, #tpu.memory_space<vmem>>, vector<8x1xf32>
      %cst_18 = arith.constant dense<0.000000e+00> : vector<8xf32>
      %165 = vector.multi_reduction <add>, %133, %cst_18 [1] : vector<8x256xf32> to vector<8xf32>
      %166 = vector.shape_cast %165 : vector<8xf32> to vector<8x1xf32>
      %167 = arith.addf %164, %166 : vector<8x1xf32>
      %c0_19 = arith.constant 0 : index
      %c0_20 = arith.constant 0 : index
      %168 = vector.load %arg13[%c0_19, %c0_20] : memref<8x1xf32, #tpu.memory_space<vmem>>, vector<8x1xf32>
      tpu.vector_store %arg13[%c0_19, %c0_20], %167 {strides = array<i32>} : memref<8x1xf32, #tpu.memory_space<vmem>>, vector<8x1xf32>,
      %c0_21 = arith.constant 0 : index
      %c0_22 = arith.constant 0 : index
      %169 = vector.load %arg14[%c0_21, %c0_22] : memref<8x1xf32, #tpu.memory_space<vmem>>, vector<8x1xf32>
      %170 = arith.mulf %133, %133 : vector<8x256xf32>
      %cst_23 = arith.constant dense<0.000000e+00> : vector<8xf32>
      %171 = vector.multi_reduction <add>, %170, %cst_23 [1] : vector<8x256xf32> to vector<8xf32>
      %172 = vector.shape_cast %171 : vector<8xf32> to vector<8x1xf32>
      %173 = arith.addf %169, %172 : vector<8x1xf32>
      %c0_24 = arith.constant 0 : index
      %c0_25 = arith.constant 0 : index
      %174 = vector.load %arg14[%c0_24, %c0_25] : memref<8x1xf32, #tpu.memory_space<vmem>>, vector<8x1xf32>
      tpu.vector_store %arg14[%c0_24, %c0_25], %173 {strides = array<i32>} : memref<8x1xf32, #tpu.memory_space<vmem>>, vector<8x1xf32>,
      %c0_26 = arith.constant 0 : index
      %c0_27 = arith.constant 0 : index
      %175 = vector.load %arg15[%c0_26, %c0_27] : memref<8x1xf32, #tpu.memory_space<vmem>>, vector<8x1xf32>
      %cst_28 = arith.constant dense<0.000000e+00> : vector<8xf32>
      %176 = vector.multi_reduction <add>, %157, %cst_28 [1] : vector<8x256xf32> to vector<8xf32>
      %177 = vector.shape_cast %176 : vector<8xf32> to vector<8x1xf32>
      %178 = arith.addf %175, %177 : vector<8x1xf32>
      %c0_29 = arith.constant 0 : index
      %c0_30 = arith.constant 0 : index
      %179 = vector.load %arg15[%c0_29, %c0_30] : memref<8x1xf32, #tpu.memory_space<vmem>>, vector<8x1xf32>
      tpu.vector_store %arg15[%c0_29, %c0_30], %178 {strides = array<i32>} : memref<8x1xf32, #tpu.memory_space<vmem>>, vector<8x1xf32>,
      %c0_31 = arith.constant 0 : index
      %c0_32 = arith.constant 0 : index
      %180 = vector.load %arg16[%c0_31, %c0_32] : memref<8x1xf32, #tpu.memory_space<vmem>>, vector<8x1xf32>
      %181 = arith.mulf %157, %157 : vector<8x256xf32>
      %cst_33 = arith.constant dense<0.000000e+00> : vector<8xf32>
      %182 = vector.multi_reduction <add>, %181, %cst_33 [1] : vector<8x256xf32> to vector<8xf32>
      %183 = vector.shape_cast %182 : vector<8xf32> to vector<8x1xf32>
      %184 = arith.addf %180, %183 : vector<8x1xf32>
      %c0_34 = arith.constant 0 : index
      %c0_35 = arith.constant 0 : index
      %185 = vector.load %arg16[%c0_34, %c0_35] : memref<8x1xf32, #tpu.memory_space<vmem>>, vector<8x1xf32>
      tpu.vector_store %arg16[%c0_34, %c0_35], %184 {strides = array<i32>} : memref<8x1xf32, #tpu.memory_space<vmem>>, vector<8x1xf32>,
    } else {
    }
    %c1_i32 = arith.constant 1 : i32
    %161 = arith.cmpi eq, %arg0, %c1_i32 : i32
    %162 = arith.extui %161 : i1 to i32
    %c0_i32_15 = arith.constant 0 : i32
    %163 = arith.cmpi ne, %162, %c0_i32_15 : i32
    scf.if %163 {
      %c0_16 = arith.constant 0 : index
      %c0_17 = arith.constant 0 : index
      %164 = vector.load %arg13[%c0_16, %c0_17] : memref<8x1xf32, #tpu.memory_space<vmem>>, vector<8x1xf32>
      %cst_18 = arith.constant 0.001953125 : f32
      %165 = vector.broadcast %cst_18 : f32 to vector<8x1xf32>
      %166 = arith.mulf %164, %165 : vector<8x1xf32>
      %c0_19 = arith.constant 0 : index
      %c0_20 = arith.constant 0 : index
      %167 = vector.load %arg14[%c0_19, %c0_20] : memref<8x1xf32, #tpu.memory_space<vmem>>, vector<8x1xf32>
      %cst_21 = arith.constant 0.001953125 : f32
      %168 = vector.broadcast %cst_21 : f32 to vector<8x1xf32>
      %169 = arith.mulf %167, %168 : vector<8x1xf32>
      %170 = arith.mulf %166, %166 : vector<8x1xf32>
      %171 = arith.subf %169, %170 : vector<8x1xf32>
      %cst_22 = arith.constant 0.000000e+00 : f32
      %172 = vector.broadcast %cst_22 : f32 to vector<8x1xf32>
      %173 = arith.maximumf %171, %172 : vector<8x1xf32>
      %c0_23 = arith.constant 0 : index
      %c0_24 = arith.constant 0 : index
      %174 = vector.load %arg8[%c0_23, %c0_24] : memref<8x1xf32, #tpu.memory_space<vmem>>, vector<8x1xf32>
      %cst_25 = arith.constant 9.99999974E-6 : f32
      %175 = vector.broadcast %cst_25 : f32 to vector<8x1xf32>
      %176 = arith.addf %173, %175 : vector<8x1xf32>
      %177 = math.rsqrt %176 : vector<8x1xf32>
      %178 = arith.mulf %174, %177 : vector<8x1xf32>
      %c0_26 = arith.constant 0 : index
      %c0_27 = arith.constant 0 : index
      %179 = vector.load %arg9[%c0_26, %c0_27] : memref<8x1xf32, #tpu.memory_space<vmem>>, vector<8x1xf32>
      %180 = arith.mulf %166, %178 : vector<8x1xf32>
      %181 = arith.subf %179, %180 : vector<8x1xf32>
      %c0_28 = arith.constant 0 : index
      %c0_29 = arith.constant 0 : index
      %182 = vector.load %arg15[%c0_28, %c0_29] : memref<8x1xf32, #tpu.memory_space<vmem>>, vector<8x1xf32>
      %cst_30 = arith.constant 0.001953125 : f32
      %183 = vector.broadcast %cst_30 : f32 to vector<8x1xf32>
      %184 = arith.mulf %182, %183 : vector<8x1xf32>
      %c0_31 = arith.constant 0 : index
      %c0_32 = arith.constant 0 : index
      %185 = vector.load %arg16[%c0_31, %c0_32] : memref<8x1xf32, #tpu.memory_space<vmem>>, vector<8x1xf32>
      %cst_33 = arith.constant 0.001953125 : f32
      %186 = vector.broadcast %cst_33 : f32 to vector<8x1xf32>
      %187 = arith.mulf %185, %186 : vector<8x1xf32>
      %188 = arith.mulf %184, %184 : vector<8x1xf32>
      %189 = arith.subf %187, %188 : vector<8x1xf32>
      %cst_34 = arith.constant 0.000000e+00 : f32
      %190 = vector.broadcast %cst_34 : f32 to vector<8x1xf32>
      %191 = arith.maximumf %189, %190 : vector<8x1xf32>
      %c0_35 = arith.constant 0 : index
      %c0_36 = arith.constant 0 : index
      %192 = vector.load %arg10[%c0_35, %c0_36] : memref<8x1xf32, #tpu.memory_space<vmem>>, vector<8x1xf32>
      %cst_37 = arith.constant 9.99999974E-6 : f32
      %193 = vector.broadcast %cst_37 : f32 to vector<8x1xf32>
      %194 = arith.addf %191, %193 : vector<8x1xf32>
      %195 = math.rsqrt %194 : vector<8x1xf32>
      %196 = arith.mulf %192, %195 : vector<8x1xf32>
      %c0_38 = arith.constant 0 : index
      %c0_39 = arith.constant 0 : index
      %197 = vector.load %arg11[%c0_38, %c0_39] : memref<8x1xf32, #tpu.memory_space<vmem>>, vector<8x1xf32>
      %198 = arith.mulf %184, %196 : vector<8x1xf32>
      %199 = arith.subf %197, %198 : vector<8x1xf32>
      %200 = vector.broadcast %178 : vector<8x1xf32> to vector<8x256xf32>
      %201 = arith.mulf %133, %200 : vector<8x256xf32>
      %202 = vector.broadcast %196 : vector<8x1xf32> to vector<8x256xf32>
      %203 = arith.mulf %157, %202 : vector<8x256xf32>
      %204 = arith.addf %201, %203 : vector<8x256xf32>
      %205 = arith.addf %181, %199 : vector<8x1xf32>
      %206 = vector.broadcast %205 : vector<8x1xf32> to vector<8x256xf32>
      %207 = arith.addf %204, %206 : vector<8x256xf32>
      %c0_40 = arith.constant 0 : index
      %c0_41 = arith.constant 0 : index
      %c0_42 = arith.constant 0 : index
      %208 = vector.load %arg12[%c0_40, %c0_41, %c0_42] : memref<1x8x256xf32, #tpu.memory_space<vmem>>, vector<1x8x256xf32>
      %209 = vector.shape_cast %208 : vector<1x8x256xf32> to vector<8x256xf32>
      %210 = vector.shape_cast %207 : vector<8x256xf32> to vector<1x8x256xf32>
      tpu.vector_store %arg12[%c0_40, %c0_41, %c0_42], %210 {strides = array<i32>} : memref<1x8x256xf32, #tpu.memory_space<vmem>>, vector<1x8x256xf32>,
    } else {
    }
    return
  }
  func.func @transform_0(%arg0: i32, %arg1: i32, %arg2: i32) -> (i32, i32, i32) {
    %c0_i32 = arith.constant 0 : i32
    %c0_i32_0 = arith.constant 0 : i32
    return %arg1, %c0_i32, %arg2 : i32, i32, i32
  }
  func.func @transform_1(%arg0: i32, %arg1: i32, %arg2: i32) -> (i32, i32) {
    %c0_i32 = arith.constant 0 : i32
    %c0_i32_0 = arith.constant 0 : i32
    %c0_i32_1 = arith.constant 0 : i32
    return %c0_i32, %c0_i32_0 : i32, i32
  }
  func.func @transform_2(%arg0: i32, %arg1: i32, %arg2: i32) -> (i32, i32) {
    %c0_i32 = arith.constant 0 : i32
    %c0_i32_0 = arith.constant 0 : i32
    %c0_i32_1 = arith.constant 0 : i32
    return %c0_i32, %c0_i32_0 : i32, i32
  }
  func.func @transform_3(%arg0: i32, %arg1: i32, %arg2: i32) -> (i32, i32) {
    %c0_i32 = arith.constant 0 : i32
    %c0_i32_0 = arith.constant 0 : i32
    %c0_i32_1 = arith.constant 0 : i32
    return %c0_i32, %c0_i32_0 : i32, i32
  }
  func.func @transform_4(%arg0: i32, %arg1: i32, %arg2: i32) -> (i32, i32) {
    %c0_i32 = arith.constant 0 : i32
    %c0_i32_0 = arith.constant 0 : i32
    %c0_i32_1 = arith.constant 0 : i32
    return %c0_i32, %c0_i32_0 : i32, i32
  }
  func.func @transform_5(%arg0: i32, %arg1: i32, %arg2: i32) -> (i32, i32) {
    %c0_i32 = arith.constant 0 : i32
    %c0_i32_0 = arith.constant 0 : i32
    %c0_i32_1 = arith.constant 0 : i32
    return %c0_i32, %c0_i32_0 : i32, i32
  }
  func.func @transform_6(%arg0: i32, %arg1: i32, %arg2: i32) -> (i32, i32) {
    %c0_i32 = arith.constant 0 : i32
    %c0_i32_0 = arith.constant 0 : i32
    %c0_i32_1 = arith.constant 0 : i32
    return %c0_i32, %c0_i32_0 : i32, i32
  }
  func.func @transform_7(%arg0: i32, %arg1: i32, %arg2: i32) -> (i32, i32) {
    %c0_i32 = arith.constant 0 : i32
    %c0_i32_0 = arith.constant 0 : i32
    %c0_i32_1 = arith.constant 0 : i32
    return %c0_i32, %c0_i32_0 : i32, i32
  }
  func.func @transform_8(%arg0: i32, %arg1: i32, %arg2: i32) -> (i32, i32) {
    %c0_i32 = arith.constant 0 : i32
    %c0_i32_0 = arith.constant 0 : i32
    %c0_i32_1 = arith.constant 0 : i32
    return %c0_i32, %c0_i32_0 : i32, i32
  }
  func.func @transform_9(%arg0: i32, %arg1: i32, %arg2: i32) -> (i32, i32, i32) {
    %0 = arith.muli %arg1, %arg0 : i32
    %1 = arith.muli %arg2, %arg0 : i32
    %c0_i32 = arith.constant 0 : i32
    %c0_i32_0 = arith.constant 0 : i32
    return %0, %c0_i32, %1 : i32, i32, i32
  }
}

</mosaic_0001>

<llo_original>
// kernel: tpu_custom_call.1
$region0: #{tpu_custom_call.1}
  #allocation0 [shape = 'u32[]', space=smem, size = 0x4, offset = 0x4, fixed_abs, tag = 'smem constant byte address 0x4 - core index']
  #allocation1 [shape = 'u32[144,128]{1,0:T(1,128)}', space=vmem, size = 0x12000, scoped, tag = 'internal scratch']
  #allocation2 [shape = 'f32[8,1]{1,0:T(8,128)}', space=vmem, size = 0x1000, scoped, tag = 'scratch operand']
  #allocation3 [shape = 'f32[8,1]{1,0:T(8,128)}', space=vmem, size = 0x1000, scoped, tag = 'scratch operand']
  #allocation4 [shape = 'f32[8,1]{1,0:T(8,128)}', space=vmem, size = 0x1000, scoped, tag = 'scratch operand']
  #allocation5 [shape = 'f32[8,1]{1,0:T(8,128)}', space=vmem, size = 0x1000, scoped, tag = 'scratch operand']
  %s0 = inlined_call_operand.vmem [shape: f32[2,4,256], index: 0, kind: input, shape index: {}]
  %s1 = inlined_call_operand.vmem [shape: f32[16,4], index: 1, kind: input, shape index: {}]
  %s2 = inlined_call_operand.vmem [shape: f32[16,1], index: 2, kind: input, shape index: {}]
  %s3 = inlined_call_operand.vmem [shape: f32[8,16], index: 3, kind: input, shape index: {}]
  %s4 = inlined_call_operand.vmem [shape: f32[8,4], index: 4, kind: input, shape index: {}]
  %s5 = inlined_call_operand.vmem [shape: f32[8,1], index: 5, kind: input, shape index: {}]
  %s6 = inlined_call_operand.vmem [shape: f32[8,1], index: 6, kind: input, shape index: {}]
  %s7 = inlined_call_operand.vmem [shape: f32[8,1], index: 7, kind: input, shape index: {}]
  %s8 = inlined_call_operand.vmem [shape: f32[8,1], index: 8, kind: input, shape index: {}]
  %s9 = inlined_call_operand.hbm [shape: f32[2,8,256], index: 9, kind: output, shape index: {}]
  %s10 = sld [smem:[#allocation0]]
  $region81: #{tpu_custom_call.1} parent=0
    _
  %s12 = ssub.s32 1, %s10
  %s13 = scalar_select 0, %s12, %s10
  $region1: #{tpu_custom_call.1} parent=0
    #allocation6 [shape = 'u8[16384]{0}', space=vmem, size = 0x4000, scoped, tag = 'output window, operand 0']
    #allocation7 [shape = 's32[2]{0}', space=sflag, size = 0x8, scoped, tag = 'scoped memory for tpu_custom_call.1']
    %14 = vsyncpa [#allocation7], 0
    %s15 = scalar_lea.sflag [#allocation7], 1
    %16 = vsyncpa %s15, 0
    loop: start=0, step=1, limit=6
    $region2: #{tpu_custom_call.1} parent=1 // loop_pre_header
      _
    $region3: #{tpu_custom_call.1} parent=1 // loop_header
      %s18 = sphi 0, %s22
      %p19 = scmp.ge.s32.totalorder %s18, 6
      %s25 = sphi 0, %s44
      %s26 = sphi 0, %s40
      %s27 = sphi 0, %s36
      %s28 = sphi 0, %s25
      %s29 = sphi 0, %s26
      %s30 = sphi 0, %s27
      %s31 = sphi 0, %s28
      %s32 = sphi 0, %s29
      %s33 = sphi 0, %s30
      %s49 = sphi 0, %s51
      %s52 = sphi 0, %s49
      %s53 = sphi 0, %s52
      %s69 = sphi 0, %s53
      %s73 = sphi 0, %s73
      %s75 = sphi 0, %s73
      %s76 = sphi 0, %s75
      %s90 = sphi 0, %s76
      %s94 = sphi 0, %s94
      %s96 = sphi 0, %s94
      %s97 = sphi 0, %s96
      %s111 = sphi 0, %s97
      %s115 = sphi 0, %s115
      %s117 = sphi 0, %s115
      %s118 = sphi 0, %s117
      %s132 = sphi 0, %s118
      %s136 = sphi 0, %s136
      %s138 = sphi 0, %s136
      %s139 = sphi 0, %s138
      %s153 = sphi 0, %s139
      %s157 = sphi 0, %s157
      %s159 = sphi 0, %s157
      %s160 = sphi 0, %s159
      %s174 = sphi 0, %s160
      %s178 = sphi 0, %s178
      %s180 = sphi 0, %s178
      %s181 = sphi 0, %s180
      %s195 = sphi 0, %s181
      %s199 = sphi 0, %s199
      %s201 = sphi 0, %s199
      %s202 = sphi 0, %s201
      %s216 = sphi 0, %s202
      %s220 = sphi 0, %s220
      %s222 = sphi 0, %s220
      %s223 = sphi 0, %s222
      %s237 = sphi 0, %s223
      %s249 = sphi 0, %s251
      %s252 = sphi 0, %s249
      %s253 = sphi 0, %s252
      %s269 = sphi 0, %s253
    $region4: #{tpu_custom_call.1} parent=1 // loop_header_branch
      %21 = sbr.rel (%p19) target = $region8
    $region5: #{tpu_custom_call.1} parent=1 // loop_body
      %s23 = ssub.s32 %s18, 1
      %s24 = ssub.s32 %s18, 2
      %s34 = sadd.s32 1, %s27
      %p35 = scmp.ge.s32.totalorder %s34, 1
      %s36 = scalar_select %p35, 0, %s34
      %s37 = sadd.s32 1, %s26
      %s38 = scalar_select %p35, %s37, %s26
      %p39 = scmp.ge.s32.totalorder %s38, 2
      %s40 = scalar_select %p39, 0, %s38
      %s41 = sadd.s32 1, %s25
      %s42 = scalar_select %p39, %s41, %s25
      %p43 = scmp.ge.s32.totalorder %s42, 2
      %s44 = scalar_select %p43, 0, %s42
      %s45 = ssub.s32 %s26, %s40
      %s46 = ssub.s32 %s27, %s36
      %s47 = sor.u32 %s45, %s46
      %p48 = scmp.eq.s32.totalorder %s47, 0
      %s50 = sadd.s32 %s49, 1
      %s51 = scalar_select %p48, %s49, %s50
      %p54 = pneg %p48
      %p55 = scmp.eq.s32.totalorder %s18, 3
      %p56 = por %p54, %p55
      %p57 = scmp.ne.s32.totalorder %s49, %s52
      %p58 = scmp.eq.s32.totalorder %s18, 0
      %p59 = por %p57, %p58
      %p60 = scmp.ne.s32.totalorder %s49, %s52
      %p61 = scmp.eq.s32.totalorder %s23, 3
      %p62 = por %p60, %p61
      %p63 = scmp.ne.s32.totalorder %s52, %s53
      %p64 = scmp.eq.s32.totalorder %s23, 0
      %p65 = por %p63, %p64
      %p66 = scmp.ne.s32.totalorder %s52, %s53
      %p67 = scmp.eq.s32.totalorder %s24, 3
      %p68 = por %p66, %p67
      %p70 = scmp.ne.s32.totalorder %s53, %s69
      %p71 = scmp.eq.s32.totalorder %s24, 0
      %p72 = por %p70, %p71
      %s74 = sadd.s32 %s73, 1
      %p77 = scmp.eq.s32.totalorder %s18, 3
      %p78 = scmp.ne.s32.totalorder %s73, %s75
      %p79 = scmp.eq.s32.totalorder %s18, 0
      %p80 = por %p78, %p79
      %p81 = scmp.ne.s32.totalorder %s73, %s75
      %p82 = scmp.eq.s32.totalorder %s23, 3
      %p83 = por %p81, %p82
      %p84 = scmp.ne.s32.totalorder %s75, %s76
      %p85 = scmp.eq.s32.totalorder %s23, 0
      %p86 = por %p84, %p85
      %p87 = scmp.ne.s32.totalorder %s75, %s76
      %p88 = scmp.eq.s32.totalorder %s24, 3
      %p89 = por %p87, %p88
      %p91 = scmp.ne.s32.totalorder %s76, %s90
      %p92 = scmp.eq.s32.totalorder %s24, 0
      %p93 = por %p91, %p92
      %s95 = sadd.s32 %s94, 1
      %p98 = scmp.eq.s32.totalorder %s18, 3
      %p99 = scmp.ne.s32.totalorder %s94, %s96
      %p100 = scmp.eq.s32.totalorder %s18, 0
      %p101 = por %p99, %p100
      %p102 = scmp.ne.s32.totalorder %s94, %s96
      %p103 = scmp.eq.s32.totalorder %s23, 3
      %p104 = por %p102, %p103
      %p105 = scmp.ne.s32.totalorder %s96, %s97
      %p106 = scmp.eq.s32.totalorder %s23, 0
      %p107 = por %p105, %p106
      %p108 = scmp.ne.s32.totalorder %s96, %s97
      %p109 = scmp.eq.s32.totalorder %s24, 3
      %p110 = por %p108, %p109
      %p112 = scmp.ne.s32.totalorder %s97, %s111
      %p113 = scmp.eq.s32.totalorder %s24, 0
      %p114 = por %p112, %p113
      %s116 = sadd.s32 %s115, 1
      %p119 = scmp.eq.s32.totalorder %s18, 3
      %p120 = scmp.ne.s32.totalorder %s115, %s117
      %p121 = scmp.eq.s32.totalorder %s18, 0
      %p122 = por %p120, %p121
      %p123 = scmp.ne.s32.totalorder %s115, %s117
      %p124 = scmp.eq.s32.totalorder %s23, 3
      %p125 = por %p123, %p124
      %p126 = scmp.ne.s32.totalorder %s117, %s118
      %p127 = scmp.eq.s32.totalorder %s23, 0
      %p128 = por %p126, %p127
      %p129 = scmp.ne.s32.totalorder %s117, %s118
      %p130 = scmp.eq.s32.totalorder %s24, 3
      %p131 = por %p129, %p130
      %p133 = scmp.ne.s32.totalorder %s118, %s132
      %p134 = scmp.eq.s32.totalorder %s24, 0
      %p135 = por %p133, %p134
      %s137 = sadd.s32 %s136, 1
      %p140 = scmp.eq.s32.totalorder %s18, 3
      %p141 = scmp.ne.s32.totalorder %s136, %s138
      %p142 = scmp.eq.s32.totalorder %s18, 0
      %p143 = por %p141, %p142
      %p144 = scmp.ne.s32.totalorder %s136, %s138
      %p145 = scmp.eq.s32.totalorder %s23, 3
      %p146 = por %p144, %p145
      %p147 = scmp.ne.s32.totalorder %s138, %s139
      %p148 = scmp.eq.s32.totalorder %s23, 0
      %p149 = por %p147, %p148
      %p150 = scmp.ne.s32.totalorder %s138, %s139
      %p151 = scmp.eq.s32.totalorder %s24, 3
      %p152 = por %p150, %p151
      %p154 = scmp.ne.s32.totalorder %s139, %s153
      %p155 = scmp.eq.s32.totalorder %s24, 0
      %p156 = por %p154, %p155
      %s158 = sadd.s32 %s157, 1
      %p161 = scmp.eq.s32.totalorder %s18, 3
      %p162 = scmp.ne.s32.totalorder %s157, %s159
      %p163 = scmp.eq.s32.totalorder %s18, 0
      %p164 = por %p162, %p163
      %p165 = scmp.ne.s32.totalorder %s157, %s159
      %p166 = scmp.eq.s32.totalorder %s23, 3
      %p167 = por %p165, %p166
      %p168 = scmp.ne.s32.totalorder %s159, %s160
      %p169 = scmp.eq.s32.totalorder %s23, 0
      %p170 = por %p168, %p169
      %p171 = scmp.ne.s32.totalorder %s159, %s160
      %p172 = scmp.eq.s32.totalorder %s24, 3
      %p173 = por %p171, %p172
      %p175 = scmp.ne.s32.totalorder %s160, %s174
      %p176 = scmp.eq.s32.totalorder %s24, 0
      %p177 = por %p175, %p176
      %s179 = sadd.s32 %s178, 1
      %p182 = scmp.eq.s32.totalorder %s18, 3
      %p183 = scmp.ne.s32.totalorder %s178, %s180
      %p184 = scmp.eq.s32.totalorder %s18, 0
      %p185 = por %p183, %p184
      %p186 = scmp.ne.s32.totalorder %s178, %s180
      %p187 = scmp.eq.s32.totalorder %s23, 3
      %p188 = por %p186, %p187
      %p189 = scmp.ne.s32.totalorder %s180, %s181
      %p190 = scmp.eq.s32.totalorder %s23, 0
      %p191 = por %p189, %p190
      %p192 = scmp.ne.s32.totalorder %s180, %s181
      %p193 = scmp.eq.s32.totalorder %s24, 3
      %p194 = por %p192, %p193
      %p196 = scmp.ne.s32.totalorder %s181, %s195
      %p197 = scmp.eq.s32.totalorder %s24, 0
      %p198 = por %p196, %p197
      %s200 = sadd.s32 %s199, 1
      %p203 = scmp.eq.s32.totalorder %s18, 3
      %p204 = scmp.ne.s32.totalorder %s199, %s201
      %p205 = scmp.eq.s32.totalorder %s18, 0
      %p206 = por %p204, %p205
      %p207 = scmp.ne.s32.totalorder %s199, %s201
      %p208 = scmp.eq.s32.totalorder %s23, 3
      %p209 = por %p207, %p208
      %p210 = scmp.ne.s32.totalorder %s201, %s202
      %p211 = scmp.eq.s32.totalorder %s23, 0
      %p212 = por %p210, %p211
      %p213 = scmp.ne.s32.totalorder %s201, %s202
      %p214 = scmp.eq.s32.totalorder %s24, 3
      %p215 = por %p213, %p214
      %p217 = scmp.ne.s32.totalorder %s202, %s216
      %p218 = scmp.eq.s32.totalorder %s24, 0
      %p219 = por %p217, %p218
      %s221 = sadd.s32 %s220, 1
      %p224 = scmp.eq.s32.totalorder %s18, 3
      %p225 = scmp.ne.s32.totalorder %s220, %s222
      %p226 = scmp.eq.s32.totalorder %s18, 0
      %p227 = por %p225, %p226
      %p228 = scmp.ne.s32.totalorder %s220, %s222
      %p229 = scmp.eq.s32.totalorder %s23, 3
      %p230 = por %p228, %p229
      %p231 = scmp.ne.s32.totalorder %s222, %s223
      %p232 = scmp.eq.s32.totalorder %s23, 0
      %p233 = por %p231, %p232
      %p234 = scmp.ne.s32.totalorder %s222, %s223
      %p235 = scmp.eq.s32.totalorder %s24, 3
      %p236 = por %p234, %p235
      %p238 = scmp.ne.s32.totalorder %s223, %s237
      %p239 = scmp.eq.s32.totalorder %s24, 0
      %p240 = por %p238, %p239
      %s241 = smul.u32 %s26, %s25
      %s242 = smul.u32 %s27, %s25
      %s243 = smul.u32 %s40, %s44
      %s244 = smul.u32 %s36, %s44
      %s245 = ssub.s32 %s241, %s243
      %s246 = ssub.s32 %s242, %s244
      %s247 = sor.u32 %s245, %s246
      %p248 = scmp.eq.s32.totalorder %s247, 0
      %s250 = sadd.s32 %s249, 1
      %s251 = scalar_select %p248, %s249, %s250
      %p254 = pneg %p248
      %p255 = scmp.eq.s32.totalorder %s18, 3
      %p256 = por %p254, %p255
      %p257 = scmp.ne.s32.totalorder %s249, %s252
      %p258 = scmp.eq.s32.totalorder %s18, 0
      %p259 = por %p257, %p258
      %p260 = scmp.ne.s32.totalorder %s249, %s252
      %p261 = scmp.eq.s32.totalorder %s23, 3
      %p262 = por %p260, %p261
      %p263 = scmp.ne.s32.totalorder %s252, %s253
      %p264 = scmp.eq.s32.totalorder %s23, 0
      %p265 = por %p263, %p264
      %p266 = scmp.ne.s32.totalorder %s252, %s253
      %p267 = scmp.eq.s32.totalorder %s24, 3
      %p268 = por %p266, %p267
      %p270 = scmp.ne.s32.totalorder %s253, %s269
      %p271 = scmp.eq.s32.totalorder %s24, 0
      %p272 = por %p270, %p271
      %p273 = scmp.le.s32.totalorder 1, %s18
      %p274 = scmp.lt.s32.totalorder %s18, 5
      %p275 = pnand %p273, %p274
      %p276 = pneg %p275
      // Predicated region
      $region9: #{tpu_custom_call.1} parent=5 // pred_check
        _
      $region10: #{tpu_custom_call.1} parent=5 // pred_check_branch
        %278 = sbr.rel (%p275) target = $region12
      $region11: #{tpu_custom_call.1} parent=5 // pred_region
        %s279 = ssub.s32 %s18, 1
        // Predicated region
        $region13: #{tpu_custom_call.1} parent=11 // pred_check
          %p280 = pneg %p86
        $region14: #{tpu_custom_call.1} parent=11 // pred_check_branch
          %282 = sbr.rel (%p280) target = $region16
        $region15: #{tpu_custom_call.1} parent=11 // pred_region
          _
        $region16: #{tpu_custom_call.1} parent=11 // pred_fallthru
          _
        // Predicated region
        $region17: #{tpu_custom_call.1} parent=11 // pred_check
          %p283 = pneg %p107
        $region18: #{tpu_custom_call.1} parent=11 // pred_check_branch
          %285 = sbr.rel (%p283) target = $region20
        $region19: #{tpu_custom_call.1} parent=11 // pred_region
          _
        $region20: #{tpu_custom_call.1} parent=11 // pred_fallthru
          _
        // Predicated region
        $region21: #{tpu_custom_call.1} parent=11 // pred_check
          %p286 = pneg %p128
        $region22: #{tpu_custom_call.1} parent=11 // pred_check_branch
          %288 = sbr.rel (%p286) target = $region24
        $region23: #{tpu_custom_call.1} parent=11 // pred_region
          _
        $region24: #{tpu_custom_call.1} parent=11 // pred_fallthru
          _
        // Predicated region
        $region25: #{tpu_custom_call.1} parent=11 // pred_check
          %p289 = pneg %p149
        $region26: #{tpu_custom_call.1} parent=11 // pred_check_branch
          %291 = sbr.rel (%p289) target = $region28
        $region27: #{tpu_custom_call.1} parent=11 // pred_region
          _
        $region28: #{tpu_custom_call.1} parent=11 // pred_fallthru
          _
        // Predicated region
        $region29: #{tpu_custom_call.1} parent=11 // pred_check
          %p292 = pneg %p170
        $region30: #{tpu_custom_call.1} parent=11 // pred_check_branch
          %294 = sbr.rel (%p292) target = $region32
        $region31: #{tpu_custom_call.1} parent=11 // pred_region
          _
        $region32: #{tpu_custom_call.1} parent=11 // pred_fallthru
          _
        // Predicated region
        $region33: #{tpu_custom_call.1} parent=11 // pred_check
          %p295 = pneg %p191
        $region34: #{tpu_custom_call.1} parent=11 // pred_check_branch
          %297 = sbr.rel (%p295) target = $region36
        $region35: #{tpu_custom_call.1} parent=11 // pred_region
          _
        $region36: #{tpu_custom_call.1} parent=11 // pred_fallthru
          _
        // Predicated region
        $region37: #{tpu_custom_call.1} parent=11 // pred_check
          %p298 = pneg %p212
        $region38: #{tpu_custom_call.1} parent=11 // pred_check_branch
          %300 = sbr.rel (%p298) target = $region40
        $region39: #{tpu_custom_call.1} parent=11 // pred_region
          _
        $region40: #{tpu_custom_call.1} parent=11 // pred_fallthru
          _
        // Predicated region
        $region41: #{tpu_custom_call.1} parent=11 // pred_check
          %p301 = pneg %p233
        $region42: #{tpu_custom_call.1} parent=11 // pred_check_branch
          %303 = sbr.rel (%p301) target = $region44
        $region43: #{tpu_custom_call.1} parent=11 // pred_region
          _
        $region44: #{tpu_custom_call.1} parent=11 // pred_fallthru
          _
      $region12: #{tpu_custom_call.1} parent=5 // pred_fallthru
        _
      %p304 = scmp.lt.s32.totalorder %s18, 4
      // Predicated region
      $region45: #{tpu_custom_call.1} parent=5 // pred_check
        %p305 = pneg %p304
      $region46: #{tpu_custom_call.1} parent=5 // pred_check_branch
        %307 = sbr.rel (%p305) target = $region48
      $region47: #{tpu_custom_call.1} parent=5 // pred_region
        // Predicated region
        $region49: #{tpu_custom_call.1} parent=47 // pred_check
          %p308 = pneg %p59
        $region50: #{tpu_custom_call.1} parent=47 // pred_check_branch
          %310 = sbr.rel (%p308) target = $region52
        $region51: #{tpu_custom_call.1} parent=47 // pred_region
          %s311 = smul.u32 2, %s27
          %p312 = scmp.lt.s32.totalorder %s26, 1
          %s313 = scalar_select %p312, %s26, 1
          %p314 = scmp.lt.s32.totalorder %s311, 1
          %s315 = scalar_select %p314, %s311, 1
          %s316 = smul.addr %s313, 2
          %s317 = sadd.s32 %s315, %s316
          %s318 = smul.addr %s317, 4
          %s319 = scalar_lea.vmem %s0, %s318
          %s320 = smul.u32 2, %s27
        $region52: #{tpu_custom_call.1} parent=47 // pred_fallthru
          _
      $region48: #{tpu_custom_call.1} parent=5 // pred_fallthru
        _
      %p321 = scmp.le.s32.totalorder 1, %s18
      %p322 = scmp.lt.s32.totalorder %s18, 5
      %p323 = pnand %p321, %p322
      %p324 = pneg %p323
      // Predicated region
      $region53: #{tpu_custom_call.1} parent=5 // pred_check
        _
      $region54: #{tpu_custom_call.1} parent=5 // pred_check_branch
        %326 = sbr.rel (%p323) target = $region56
      $region55: #{tpu_custom_call.1} parent=5 // pred_region
        %s327 = ssub.s32 %s18, 1
        %s328 = smul.u32 2, %s30
        %p329 = scmp.lt.s32.totalorder %s29, 1
        %s330 = scalar_select %p329, %s29, 1
        %p331 = scmp.lt.s32.totalorder %s328, 1
        %s332 = scalar_select %p331, %s328, 1
        %s333 = smul.addr %s330, 2
        %s334 = sadd.s32 %s332, %s333
        %s335 = smul.addr %s334, 4
        %s336 = scalar_lea.vmem %s0, %s335
        %p337 = pneg %p65
        %p338 = pneg %p62
        %p339 = pneg %p86
        %p340 = pneg %p83
        %p341 = pneg %p107
        %p342 = pneg %p104
        %p343 = pneg %p128
        %p344 = pneg %p125
        %p345 = pneg %p149
        %p346 = pneg %p146
        %p347 = pneg %p170
        %p348 = pneg %p167
        %p349 = pneg %p191
        %p350 = pneg %p188
        %p351 = pneg %p212
        %p352 = pneg %p209
        %p353 = pneg %p233
        %p354 = pneg %p230
        %p355 = pneg %p265
        %p356 = pneg %p262
        %s357 = sand.u32 %s252, 1
        %s358 = scalar_lea.sflag [#allocation7], %s357
        %s359 = sand.u32 %s252, 1
        %s360 = smul.addr %s359, 16
        %s361 = scalar_lea.vmem [#allocation6], %s360
        %s362 = smul.u32 2, %s30
        %p363 = scmp.lt.s32.totalorder %s29, 1
        %s364 = scalar_select %p363, %s29, 1
        %p365 = scmp.lt.s32.totalorder %s362, 1
        %s366 = scalar_select %p365, %s362, 1
        %s367 = smul.addr %s364, 2
        %s368 = sadd.s32 %s366, %s367
        %s369 = smul.addr %s368, 4
        %s370 = scalar_lea.vmem %s0, %s369
        %s371 = smul.u32 2, %s30
        %s372 = smul.u32 %s29, %s28
        %s373 = smul.u32 %s30, %s28
        %s374 = smul.u32 2, %s373
        %p375 = scmp.eq.s32.totalorder %s28, 0
        %p376 = scmp.eq.s32.totalorder %s29, 0
        %p377 = pnand %p375, %p376
        %p378 = pneg %p377
        %p379 = scmp.eq.s32.totalorder %s30, 0
        %p380 = pnand %p378, %p379
        %p381 = pneg %p380
        // Predicated region
        $region57: #{tpu_custom_call.1} parent=55 // pred_check
          _
        $region58: #{tpu_custom_call.1} parent=55 // pred_check_branch
          %383 = sbr.rel (%p380) target = $region60
        $region59: #{tpu_custom_call.1} parent=55 // pred_region
          %vm384 = vcmask 7168
          %385 = vst.msk [vmem:[#allocation2] sm:$0xff] %vm384, 0.0
          %386 = vst.msk [vmem:[#allocation3] sm:$0xff] %vm384, 0.0
          %387 = vst.msk [vmem:[#allocation4] sm:$0xff] %vm384, 0.0
          %388 = vst.msk [vmem:[#allocation5] sm:$0xff] %vm384, 0.0
        $region60: #{tpu_custom_call.1} parent=55 // pred_fallthru
          _
        %v389 = vld [vmem:[%s370] sm:$0xff]
        %v390 = vld [vmem:[%s1] sm:$0xff]
        %v391 = vld [vmem:[%s1 + $0x8] sm:$0xff]
        %393 = vset.pattern.permute.xlu0 0
        %394 = vperm.xlu0 %393, %v390
        %v395 = vpop.permute.xlu0 %394
        %398 = vset.pattern.permute.xlu0 0
        %399 = vperm.xlu0 %398, %v391
        %v400 = vpop.permute.xlu0 %399
        %v403 = vlaneseq
        %v404 = vshrl.u32 %v403, 7
        %v405 = vsub.s32 0, %v404
        %v406 = vrot.slane %v389, %v405
        %v407 = vlaneseq
        %v408 = vshrl.u32 %v407, 7
        %v409 = vsub.s32 4, %v408
        %v410 = vrot.slane %v389, %v409
        %v413 = vlaneseq
        %v414 = vshrl.u32 %v413, 7
        %v415 = vsub.s32 0, %v414
        %v416 = vrot.slane %v406, %v415
        %v417 = vlaneseq
        %v418 = vshrl.u32 %v417, 7
        %v419 = vsub.s32 0, %v418
        %v420 = vrot.slane %v410, %v419
        %v421 = vmul.f32 %v395, %v416
        %v422 = vmul.f32 %v395, %v420
        %v423 = vmul.f32 %v400, %v416
        %v424 = vmul.f32 %v400, %v420
        %425 = vset.pattern.permute.xlu0 1
        %426 = vperm.xlu0 %425, %v390
        %v427 = vpop.permute.xlu0 %426
        %429 = vset.pattern.permute.xlu0 1
        %430 = vperm.xlu0 %429, %v391
        %v431 = vpop.permute.xlu0 %430
        %v433 = vlaneseq
        %v434 = vshrl.u32 %v433, 7
        %v435 = vsub.s32 1, %v434
        %v436 = vrot.slane %v389, %v435
        %v437 = vlaneseq
        %v438 = vshrl.u32 %v437, 7
        %v439 = vsub.s32 5, %v438
        %v440 = vrot.slane %v389, %v439
        %v443 = vlaneseq
        %v444 = vshrl.u32 %v443, 7
        %v445 = vsub.s32 1, %v444
        %v446 = vrot.slane %v436, %v445
        %v447 = vlaneseq
        %v448 = vshrl.u32 %v447, 7
        %v449 = vsub.s32 1, %v448
        %v450 = vrot.slane %v440, %v449
        %v451 = vmul.f32 %v427, %v446
        %v452 = vmul.f32 %v427, %v450
        %v453 = vmul.f32 %v431, %v446
        %v454 = vmul.f32 %v431, %v450
        %v455 = vadd.f32 %v421, %v451
        %v456 = vadd.f32 %v422, %v452
        %v457 = vadd.f32 %v423, %v453
        %v458 = vadd.f32 %v424, %v454
        %459 = vset.pattern.permute.xlu0 2
        %460 = vperm.xlu0 %459, %v390
        %v461 = vpop.permute.xlu0 %460
        %463 = vset.pattern.permute.xlu0 2
        %464 = vperm.xlu0 %463, %v391
        %v465 = vpop.permute.xlu0 %464
        %v467 = vlaneseq
        %v468 = vshrl.u32 %v467, 7
        %v469 = vsub.s32 2, %v468
        %v470 = vrot.slane %v389, %v469
        %v471 = vlaneseq
        %v472 = vshrl.u32 %v471, 7
        %v473 = vsub.s32 6, %v472
        %v474 = vrot.slane %v389, %v473
        %v477 = vlaneseq
        %v478 = vshrl.u32 %v477, 7
        %v479 = vsub.s32 2, %v478
        %v480 = vrot.slane %v470, %v479
        %v481 = vlaneseq
        %v482 = vshrl.u32 %v481, 7
        %v483 = vsub.s32 2, %v482
        %v484 = vrot.slane %v474, %v483
        %v485 = vmul.f32 %v461, %v480
        %v486 = vmul.f32 %v461, %v484
        %v487 = vmul.f32 %v465, %v480
        %v488 = vmul.f32 %v465, %v484
        %v489 = vadd.f32 %v455, %v485
        %v490 = vadd.f32 %v456, %v486
        %v491 = vadd.f32 %v457, %v487
        %v492 = vadd.f32 %v458, %v488
        %493 = vset.pattern.permute.xlu0 3
        %494 = vperm.xlu0 %493, %v390
        %v495 = vpop.permute.xlu0 %494
        %497 = vset.pattern.permute.xlu0 3
        %498 = vperm.xlu0 %497, %v391
        %v499 = vpop.permute.xlu0 %498
        %v501 = vlaneseq
        %v502 = vshrl.u32 %v501, 7
        %v503 = vsub.s32 3, %v502
        %v504 = vrot.slane %v389, %v503
        %v505 = vlaneseq
        %v506 = vshrl.u32 %v505, 7
        %v507 = vsub.s32 7, %v506
        %v508 = vrot.slane %v389, %v507
        %v511 = vlaneseq
        %v512 = vshrl.u32 %v511, 7
        %v513 = vsub.s32 3, %v512
        %v514 = vrot.slane %v504, %v513
        %v515 = vlaneseq
        %v516 = vshrl.u32 %v515, 7
        %v517 = vsub.s32 3, %v516
        %v518 = vrot.slane %v508, %v517
        %v519 = vmul.f32 %v495, %v514
        %v520 = vmul.f32 %v495, %v518
        %v521 = vmul.f32 %v499, %v514
        %v522 = vmul.f32 %v499, %v518
        %v523 = vadd.f32 %v489, %v519
        %v524 = vadd.f32 %v490, %v520
        %v525 = vadd.f32 %v491, %v521
        %v526 = vadd.f32 %v492, %v522
        %v527 = vld [vmem:[%s2] sm:$0xff]
        %v528 = vld [vmem:[%s2 + $0x8] sm:$0xff]
        %530 = vset.pattern.permute.xlu0 0
        %531 = vperm.xlu0 %530, %v527
        %v532 = vpop.permute.xlu0 %531
        %535 = vset.pattern.permute.xlu0 0
        %536 = vperm.xlu0 %535, %v528
        %v537 = vpop.permute.xlu0 %536
        %v539 = vadd.f32 %v523, %v532
        %v540 = vadd.f32 %v524, %v532
        %v541 = vadd.f32 %v525, %v537
        %v542 = vadd.f32 %v526, %v537
        %v543 = vmax.f32 %v539, 0.0
        %v544 = vmax.f32 %v540, 0.0
        %v545 = vmax.f32 %v541, 0.0
        %v546 = vmax.f32 %v542, 0.0
        %v547 = vld [vmem:[%s3] sm:$0xff]
        %549 = vset.pattern.permute.xlu0 0
        %550 = vperm.xlu0 %549, %v547
        %v551 = vpop.permute.xlu0 %550
        %v553 = vlaneseq
        %v554 = vshrl.u32 %v553, 7
        %v555 = vsub.s32 0, %v554
        %v556 = vrot.slane %v543, %v555
        %v557 = vlaneseq
        %v558 = vshrl.u32 %v557, 7
        %v559 = vsub.s32 0, %v558
        %v560 = vrot.slane %v544, %v559
        %v561 = vmul.f32 %v551, %v556
        %v562 = vmul.f32 %v551, %v560
        %563 = vset.pattern.permute.xlu0 1
        %564 = vperm.xlu0 %563, %v547
        %v565 = vpop.permute.xlu0 %564
        %v567 = vlaneseq
        %v568 = vshrl.u32 %v567, 7
        %v569 = vsub.s32 1, %v568
        %v570 = vrot.slane %v543, %v569
        %v571 = vlaneseq
        %v572 = vshrl.u32 %v571, 7
        %v573 = vsub.s32 1, %v572
        %v574 = vrot.slane %v544, %v573
        %v575 = vmul.f32 %v565, %v570
        %v576 = vmul.f32 %v565, %v574
        %v577 = vadd.f32 %v561, %v575
        %v578 = vadd.f32 %v562, %v576
        %579 = vset.pattern.permute.xlu0 2
        %580 = vperm.xlu0 %579, %v547
        %v581 = vpop.permute.xlu0 %580
        %v583 = vlaneseq
        %v584 = vshrl.u32 %v583, 7
        %v585 = vsub.s32 2, %v584
        %v586 = vrot.slane %v543, %v585
        %v587 = vlaneseq
        %v588 = vshrl.u32 %v587, 7
        %v589 = vsub.s32 2, %v588
        %v590 = vrot.slane %v544, %v589
        %v591 = vmul.f32 %v581, %v586
        %v592 = vmul.f32 %v581, %v590
        %v593 = vadd.f32 %v577, %v591
        %v594 = vadd.f32 %v578, %v592
        %595 = vset.pattern.permute.xlu0 3
        %596 = vperm.xlu0 %595, %v547
        %v597 = vpop.permute.xlu0 %596
        %v599 = vlaneseq
        %v600 = vshrl.u32 %v599, 7
        %v601 = vsub.s32 3, %v600
        %v602 = vrot.slane %v543, %v601
        %v603 = vlaneseq
        %v604 = vshrl.u32 %v603, 7
        %v605 = vsub.s32 3, %v604
        %v606 = vrot.slane %v544, %v605
        %v607 = vmul.f32 %v597, %v602
        %v608 = vmul.f32 %v597, %v606
        %v609 = vadd.f32 %v593, %v607
        %v610 = vadd.f32 %v594, %v608
        %611 = vset.pattern.permute.xlu0 4
        %612 = vperm.xlu0 %611, %v547
        %v613 = vpop.permute.xlu0 %612
        %v615 = vlaneseq
        %v616 = vshrl.u32 %v615, 7
        %v617 = vsub.s32 4, %v616
        %v618 = vrot.slane %v543, %v617
        %v619 = vlaneseq
        %v620 = vshrl.u32 %v619, 7
        %v621 = vsub.s32 4, %v620
        %v622 = vrot.slane %v544, %v621
        %v623 = vmul.f32 %v613, %v618
        %v624 = vmul.f32 %v613, %v622
        %v625 = vadd.f32 %v609, %v623
        %v626 = vadd.f32 %v610, %v624
        %627 = vset.pattern.permute.xlu0 5
        %628 = vperm.xlu0 %627, %v547
        %v629 = vpop.permute.xlu0 %628
        %v631 = vlaneseq
        %v632 = vshrl.u32 %v631, 7
        %v633 = vsub.s32 5, %v632
        %v634 = vrot.slane %v543, %v633
        %v635 = vlaneseq
        %v636 = vshrl.u32 %v635, 7
        %v637 = vsub.s32 5, %v636
        %v638 = vrot.slane %v544, %v637
        %v639 = vmul.f32 %v629, %v634
        %v640 = vmul.f32 %v629, %v638
        %v641 = vadd.f32 %v625, %v639
        %v642 = vadd.f32 %v626, %v640
        %643 = vset.pattern.permute.xlu0 6
        %644 = vperm.xlu0 %643, %v547
        %v645 = vpop.permute.xlu0 %644
        %v647 = vlaneseq
        %v648 = vshrl.u32 %v647, 7
        %v649 = vsub.s32 6, %v648
        %v650 = vrot.slane %v543, %v649
        %v651 = vlaneseq
        %v652 = vshrl.u32 %v651, 7
        %v653 = vsub.s32 6, %v652
        %v654 = vrot.slane %v544, %v653
        %v655 = vmul.f32 %v645, %v650
        %v656 = vmul.f32 %v645, %v654
        %v657 = vadd.f32 %v641, %v655
        %v658 = vadd.f32 %v642, %v656
        %659 = vset.pattern.permute.xlu0 7
        %660 = vperm.xlu0 %659, %v547
        %v661 = vpop.permute.xlu0 %660
        %v663 = vlaneseq
        %v664 = vshrl.u32 %v663, 7
        %v665 = vsub.s32 7, %v664
        %v666 = vrot.slane %v543, %v665
        %v667 = vlaneseq
        %v668 = vshrl.u32 %v667, 7
        %v669 = vsub.s32 7, %v668
        %v670 = vrot.slane %v544, %v669
        %v671 = vmul.f32 %v661, %v666
        %v672 = vmul.f32 %v661, %v670
        %v673 = vadd.f32 %v657, %v671
        %v674 = vadd.f32 %v658, %v672
        %675 = vset.pattern.permute.xlu0 8
        %676 = vperm.xlu0 %675, %v547
        %v677 = vpop.permute.xlu0 %676
        %v679 = vlaneseq
        %v680 = vshrl.u32 %v679, 7
        %v681 = vsub.s32 0, %v680
        %v682 = vrot.slane %v545, %v681
        %v683 = vlaneseq
        %v684 = vshrl.u32 %v683, 7
        %v685 = vsub.s32 0, %v684
        %v686 = vrot.slane %v546, %v685
        %v687 = vmul.f32 %v677, %v682
        %v688 = vmul.f32 %v677, %v686
        %v689 = vadd.f32 %v673, %v687
        %v690 = vadd.f32 %v674, %v688
        %691 = vset.pattern.permute.xlu0 9
        %692 = vperm.xlu0 %691, %v547
        %v693 = vpop.permute.xlu0 %692
        %v695 = vlaneseq
        %v696 = vshrl.u32 %v695, 7
        %v697 = vsub.s32 1, %v696
        %v698 = vrot.slane %v545, %v697
        %v699 = vlaneseq
        %v700 = vshrl.u32 %v699, 7
        %v701 = vsub.s32 1, %v700
        %v702 = vrot.slane %v546, %v701
        %v703 = vmul.f32 %v693, %v698
        %v704 = vmul.f32 %v693, %v702
        %v705 = vadd.f32 %v689, %v703
        %v706 = vadd.f32 %v690, %v704
        %707 = vset.pattern.permute.xlu0 10
        %708 = vperm.xlu0 %707, %v547
        %v709 = vpop.permute.xlu0 %708
        %v711 = vlaneseq
        %v712 = vshrl.u32 %v711, 7
        %v713 = vsub.s32 2, %v712
        %v714 = vrot.slane %v545, %v713
        %v715 = vlaneseq
        %v716 = vshrl.u32 %v715, 7
        %v717 = vsub.s32 2, %v716
        %v718 = vrot.slane %v546, %v717
        %v719 = vmul.f32 %v709, %v714
        %v720 = vmul.f32 %v709, %v718
        %v721 = vadd.f32 %v705, %v719
        %v722 = vadd.f32 %v706, %v720
        %723 = vset.pattern.permute.xlu0 11
        %724 = vperm.xlu0 %723, %v547
        %v725 = vpop.permute.xlu0 %724
        %v727 = vlaneseq
        %v728 = vshrl.u32 %v727, 7
        %v729 = vsub.s32 3, %v728
        %v730 = vrot.slane %v545, %v729
        %v731 = vlaneseq
        %v732 = vshrl.u32 %v731, 7
        %v733 = vsub.s32 3, %v732
        %v734 = vrot.slane %v546, %v733
        %v735 = vmul.f32 %v725, %v730
        %v736 = vmul.f32 %v725, %v734
        %v737 = vadd.f32 %v721, %v735
        %v738 = vadd.f32 %v722, %v736
        %739 = vset.pattern.permute.xlu0 12
        %740 = vperm.xlu0 %739, %v547
        %v741 = vpop.permute.xlu0 %740
        %v743 = vlaneseq
        %v744 = vshrl.u32 %v743, 7
        %v745 = vsub.s32 4, %v744
        %v746 = vrot.slane %v545, %v745
        %v747 = vlaneseq
        %v748 = vshrl.u32 %v747, 7
        %v749 = vsub.s32 4, %v748
        %v750 = vrot.slane %v546, %v749
        %v751 = vmul.f32 %v741, %v746
        %v752 = vmul.f32 %v741, %v750
        %v753 = vadd.f32 %v737, %v751
        %v754 = vadd.f32 %v738, %v752
        %755 = vset.pattern.permute.xlu0 13
        %756 = vperm.xlu0 %755, %v547
        %v757 = vpop.permute.xlu0 %756
        %v759 = vlaneseq
        %v760 = vshrl.u32 %v759, 7
        %v761 = vsub.s32 5, %v760
        %v762 = vrot.slane %v545, %v761
        %v763 = vlaneseq
        %v764 = vshrl.u32 %v763, 7
        %v765 = vsub.s32 5, %v764
        %v766 = vrot.slane %v546, %v765
        %v767 = vmul.f32 %v757, %v762
        %v768 = vmul.f32 %v757, %v766
        %v769 = vadd.f32 %v753, %v767
        %v770 = vadd.f32 %v754, %v768
        %771 = vset.pattern.permute.xlu0 14
        %772 = vperm.xlu0 %771, %v547
        %v773 = vpop.permute.xlu0 %772
        %v775 = vlaneseq
        %v776 = vshrl.u32 %v775, 7
        %v777 = vsub.s32 6, %v776
        %v778 = vrot.slane %v545, %v777
        %v779 = vlaneseq
        %v780 = vshrl.u32 %v779, 7
        %v781 = vsub.s32 6, %v780
        %v782 = vrot.slane %v546, %v781
        %v783 = vmul.f32 %v773, %v778
        %v784 = vmul.f32 %v773, %v782
        %v785 = vadd.f32 %v769, %v783
        %v786 = vadd.f32 %v770, %v784
        %787 = vset.pattern.permute.xlu0 15
        %788 = vperm.xlu0 %787, %v547
        %v789 = vpop.permute.xlu0 %788
        %v791 = vlaneseq
        %v792 = vshrl.u32 %v791, 7
        %v793 = vsub.s32 7, %v792
        %v794 = vrot.slane %v545, %v793
        %v795 = vlaneseq
        %v796 = vshrl.u32 %v795, 7
        %v797 = vsub.s32 7, %v796
        %v798 = vrot.slane %v546, %v797
        %v799 = vmul.f32 %v789, %v794
        %v800 = vmul.f32 %v789, %v798
        %v801 = vadd.f32 %v785, %v799
        %v802 = vadd.f32 %v786, %v800
        %v803 = vld [vmem:[%s4] sm:$0xff]
        %805 = vset.pattern.permute.xlu0 0
        %806 = vperm.xlu0 %805, %v803
        %v807 = vpop.permute.xlu0 %806
        %v809 = vmul.f32 %v807, %v416
        %v810 = vmul.f32 %v807, %v420
        %811 = vset.pattern.permute.xlu0 1
        %812 = vperm.xlu0 %811, %v803
        %v813 = vpop.permute.xlu0 %812
        %v815 = vmul.f32 %v813, %v446
        %v816 = vmul.f32 %v813, %v450
        %v817 = vadd.f32 %v809, %v815
        %v818 = vadd.f32 %v810, %v816
        %819 = vset.pattern.permute.xlu0 2
        %820 = vperm.xlu0 %819, %v803
        %v821 = vpop.permute.xlu0 %820
        %v823 = vmul.f32 %v821, %v480
        %v824 = vmul.f32 %v821, %v484
        %v825 = vadd.f32 %v817, %v823
        %v826 = vadd.f32 %v818, %v824
        %827 = vset.pattern.permute.xlu0 3
        %828 = vperm.xlu0 %827, %v803
        %v829 = vpop.permute.xlu0 %828
        %v831 = vmul.f32 %v829, %v514
        %v832 = vmul.f32 %v829, %v518
        %v833 = vadd.f32 %v825, %v831
        %v834 = vadd.f32 %v826, %v832
        // Predicated region
        $region61: #{tpu_custom_call.1} parent=55 // pred_check
          %p835 = pneg %p375
        $region62: #{tpu_custom_call.1} parent=55 // pred_check_branch
          %837 = sbr.rel (%p835) target = $region64
        $region63: #{tpu_custom_call.1} parent=55 // pred_region
          %v838 = vld [vmem:[#allocation2] sm:$0xff]
          %v839 = vadd.f32 %v801, %v802
          %840 = vadd.xlane.f32.xlu0 %v839
          %v841 = vpop.xlane.xlu0 %840
          %v842 = vadd.f32 %v838, %v841
          %vm843 = vcmask 7168
          %844 = vst.msk [vmem:[#allocation2] sm:$0xff] %vm843, %v842
          %v845 = vld [vmem:[#allocation3] sm:$0xff]
          %v846 = vmul.f32 %v801, %v801
          %v847 = vmul.f32 %v802, %v802
          %v848 = vadd.f32 %v846, %v847
          %849 = vadd.xlane.f32.xlu0 %v848
          %v850 = vpop.xlane.xlu0 %849
          %v851 = vadd.f32 %v845, %v850
          %852 = vst.msk [vmem:[#allocation3] sm:$0xff] %vm843, %v851
          %v853 = vld [vmem:[#allocation4] sm:$0xff]
          %v854 = vadd.f32 %v833, %v834
          %855 = vadd.xlane.f32.xlu0 %v854
          %v856 = vpop.xlane.xlu0 %855
          %v857 = vadd.f32 %v853, %v856
          %858 = vst.msk [vmem:[#allocation4] sm:$0xff] %vm843, %v857
          %v859 = vld [vmem:[#allocation5] sm:$0xff]
          %v860 = vmul.f32 %v833, %v833
          %v861 = vmul.f32 %v834, %v834
          %v862 = vadd.f32 %v860, %v861
          %863 = vadd.xlane.f32.xlu0 %v862
          %v864 = vpop.xlane.xlu0 %863
          %v865 = vadd.f32 %v859, %v864
          %866 = vst.msk [vmem:[#allocation5] sm:$0xff] %vm843, %v865
        $region64: #{tpu_custom_call.1} parent=55 // pred_fallthru
          _
        %p867 = scmp.eq.s32.totalorder %s28, 1
        // Predicated region
        $region65: #{tpu_custom_call.1} parent=55 // pred_check
          %p868 = pneg %p867
        $region66: #{tpu_custom_call.1} parent=55 // pred_check_branch
          %870 = sbr.rel (%p868) target = $region68
        $region67: #{tpu_custom_call.1} parent=55 // pred_region
          %v871 = vld [vmem:[#allocation2] sm:$0xff]
          %v872 = vmul.f32 %v871, 0.001953125
          %v873 = vld [vmem:[#allocation3] sm:$0xff]
          %v874 = vmul.f32 %v873, 0.001953125
          %v875 = vmul.f32 %v872, %v872
          %v876 = vsub.f32 %v874, %v875
          %v877 = vmax.f32 %v876, 0.0
          %v878 = vld [vmem:[%s5] sm:$0xff]
          %v879 = vadd.f32 %v877, 1e-05
          %v880 = vrsqrt.pop %v879
          %v881 = vmul.f32 %v878, %v880
          %v882 = vld [vmem:[%s6] sm:$0xff]
          %v883 = vmul.f32 %v872, %v881
          %v884 = vsub.f32 %v882, %v883
          %v885 = vld [vmem:[#allocation4] sm:$0xff]
          %v886 = vmul.f32 %v885, 0.001953125
          %v887 = vld [vmem:[#allocation5] sm:$0xff]
          %v888 = vmul.f32 %v887, 0.001953125
          %v889 = vmul.f32 %v886, %v886
          %v890 = vsub.f32 %v888, %v889
          %v891 = vmax.f32 %v890, 0.0
          %v892 = vld [vmem:[%s7] sm:$0xff]
          %v893 = vadd.f32 %v891, 1e-05
          %v894 = vrsqrt.pop %v893
          %v895 = vmul.f32 %v892, %v894
          %v896 = vld [vmem:[%s8] sm:$0xff]
          %v897 = vmul.f32 %v886, %v895
          %v898 = vsub.f32 %v896, %v897
          %900 = vset.pattern.permute.xlu0 0
          %901 = vperm.xlu0 %900, %v881
          %v902 = vpop.permute.xlu0 %901
          %v904 = vmul.f32 %v801, %v902
          %v905 = vmul.f32 %v802, %v902
          %907 = vset.pattern.permute.xlu0 0
          %908 = vperm.xlu0 %907, %v895
          %v909 = vpop.permute.xlu0 %908
          %v911 = vmul.f32 %v833, %v909
          %v912 = vmul.f32 %v834, %v909
          %v913 = vadd.f32 %v904, %v911
          %v914 = vadd.f32 %v905, %v912
          %v915 = vadd.f32 %v884, %v898
          %917 = vset.pattern.permute.xlu0 0
          %918 = vperm.xlu0 %917, %v915
          %v919 = vpop.permute.xlu0 %918
          %v921 = vadd.f32 %v913, %v919
          %v922 = vadd.f32 %v914, %v919
          %923 = vst [vmem:[%s361] sm:$0xff] %v921
          %924 = vst [vmem:[%s361 + $0x8] sm:$0xff] %v922
        $region68: #{tpu_custom_call.1} parent=55 // pred_fallthru
          _
        %s925 = sand.u32 %s252, 1
        %s926 = scalar_lea.sflag [#allocation7], %s925
        %s927 = sand.u32 %s252, 1
        %s928 = smul.addr %s927, 16
        %s929 = scalar_lea.vmem [#allocation6], %s928
        // Predicated region
        $region69: #{tpu_custom_call.1} parent=55 // pred_check
          %p930 = pneg %p262
        $region70: #{tpu_custom_call.1} parent=55 // pred_check_branch
          %932 = sbr.rel (%p930) target = $region72
        $region71: #{tpu_custom_call.1} parent=55 // pred_region
          %s933 = smul.u32 %s29, %s28
          %s934 = smul.u32 %s30, %s28
          %s935 = smul.u32 2, %s934
          %s937 = ssub.s32 256, 256
          %938 = vsyncadd %s926, %s937
          %s939 = smul.addr %s933, 2
          %s940 = sadd.s32 %s935, %s939
          %s941 = smul.addr %s940, 128
          %s942 = scalar_lea.hbm %s9, %s941
          %s944 = sshll.u32 %s929, 4
          %s945 = int_to_ptr.vmem [resolvable:$true] %s944
          %947 = dma.vmem_to_hbm [thread:$0]  %s945, 256, %s942, %s926
        $region72: #{tpu_custom_call.1} parent=55 // pred_fallthru
          _
      $region56: #{tpu_custom_call.1} parent=5 // pred_fallthru
        _
      %p948 = scmp.le.s32.totalorder 2, %s18
      // Predicated region
      $region73: #{tpu_custom_call.1} parent=5 // pred_check
        %p949 = pneg %p948
      $region74: #{tpu_custom_call.1} parent=5 // pred_check_branch
        %951 = sbr.rel (%p949) target = $region76
      $region75: #{tpu_custom_call.1} parent=5 // pred_region
        %s952 = ssub.s32 %s18, 2
        // Predicated region
        $region77: #{tpu_custom_call.1} parent=75 // pred_check
          %p953 = pneg %p268
        $region78: #{tpu_custom_call.1} parent=75 // pred_check_branch
          %955 = sbr.rel (%p953) target = $region80
        $region79: #{tpu_custom_call.1} parent=75 // pred_region
          %s956 = sand.u32 %s253, 1
          %s957 = scalar_lea.sflag [#allocation7], %s956
          %s958 = sand.u32 %s253, 1
          %s959 = smul.addr %s958, 16
          %s960 = scalar_lea.vmem [#allocation6], %s959
          %961 = dma.done %s957, 256
        $region80: #{tpu_custom_call.1} parent=75 // pred_fallthru
          _
      $region76: #{tpu_custom_call.1} parent=5 // pred_fallthru
        _
    $region6: #{tpu_custom_call.1} parent=1 // loop_footer
      %s22 = sadd.s32 1, %s18
    $region7: #{tpu_custom_call.1} parent=1 // loop_footer_branch
      %17 = sbr.rel target = $region3
    $region8: #{tpu_custom_call.1} parent=1 // loop_exit
      _
    %962 = vsyncpa [#allocation7], 1
    %s963 = scalar_lea.sflag [#allocation7], 1
    %964 = vsyncpa %s963, 1

</llo_original>
